<compile_context>
chip_gen: v5e
topology: v5e:2x2
jax: 0.10.0
libtpu: 0.0.40
codegen_flags: <defaults>
</compile_context>

<pallas_src>
import functools

import jax
import jax.numpy as jnp
from jax.experimental import pallas as pl
from jax.experimental.pallas import tpu as pltpu


# ----------------------------------------------------------------------------
# Kernel: one block-diagonal matmul + bias + ReLU per batch tile.
#   x_ref : [Bblk, A*Fin]     lane-dense input slab
#   w_ref : [A*Fin, A*Fout]   block-diagonal weights (grid-invariant)
#   b_ref : [1, A*Fout]       flattened bias
#   o_ref : [Bblk, A*Fout]    lane-dense output slab
# ----------------------------------------------------------------------------
def _row_wise_linear_kernel(x_ref, w_ref, b_ref, o_ref):
    y = jnp.dot(x_ref[...], w_ref[...], preferred_element_type=jnp.float32)
    y = y + b_ref[...]
    o_ref[...] = jnp.maximum(y, 0.0).astype(o_ref.dtype)


def _round_up(x, m):
    return ((x + m - 1) // m) * m


@functools.partial(jax.jit, static_argnames=("block_b",))
def row_wise_linear(x, w, b, *, block_b=None):
    """x: [B, A, Fin], w: [A, Fin, Fout], b: [A, 1, Fout] -> [B, A, Fout]."""
    B, A, Fin = x.shape
    Fout = w.shape[-1]

    # Wrapper-side block-diagonal packing (one cheap XLA op). Off-diagonal
    # blocks are exact zeros -> no cross-action leakage.
    #   W_bd[a*Fin + i, c*Fout + o] = w[a, i, o] * (a == c)
    w_bd = jnp.einsum(
        "aio,ac->aico", w, jnp.eye(A, dtype=w.dtype)
    ).reshape(A * Fin, A * Fout)
    b_flat = b.reshape(1, A * Fout)
    x_flat = x.reshape(B, A * Fin)        # free contiguous reshape, no transpose

    if block_b is None:
        if B <= 512:
            # Whole batch in one step at small B (latency-dominated anyway).
            block_b = B
        else:
            # >= 2 grid steps so both v7x TensorCores get work; 512-1024 row
            # blocks amortize per-step overhead and keep stores wide.
            block_b = min(1024, _round_up(pl.cdiv(B, 2), 8))
    grid = (pl.cdiv(B, block_b),)

    out_flat = pl.pallas_call(
        _row_wise_linear_kernel,
        out_shape=jax.ShapeDtypeStruct((B, A * Fout), jnp.float32),
        grid=grid,
        in_specs=[
            pl.BlockSpec((block_b, A * Fin), lambda i: (i, 0)),
            pl.BlockSpec((A * Fin, A * Fout), lambda i: (0, 0)),  # grid-invariant
            pl.BlockSpec((1, A * Fout), lambda i: (0, 0)),        # grid-invariant
        ],
        out_specs=pl.BlockSpec((block_b, A * Fout), lambda i: (i, 0)),
        compiler_params=pltpu.CompilerParams(
            dimension_semantics=("parallel",)),  # batch rows independent (v7x 2-TC)
    )(x_flat, w_bd, b_flat)
    # Free contiguous reshape (no transpose) back to [B, A, Fout].
    return out_flat.reshape(B, A, Fout)


# ----------------------------------------------------------------------------
# Pure-JAX reference (mirrors the PyTorch module exactly).
# ----------------------------------------------------------------------------
def row_wise_linear_ref(x, w, b):
    # y[:, a, :] = relu(x[:, a, :] @ w[a] + b[a])
    y = jnp.einsum("bai,aio->bao", x, w) + b[:, 0, :][None, :, :]
    return jnp.maximum(y, 0.0)


# ----------------------------------------------------------------------------
# Main
# ----------------------------------------------------------------------------
if __name__ == "__main__":
    B = 4                  # batch
    max_action_num = 8     # A
    feature_dim = 48       # Fin
    inner_output_dim = 32  # Fout

    key = jax.random.PRNGKey(0)
    kx, kw, kb = jax.random.split(key, 3)

    x = jax.random.normal(kx, (B, max_action_num, feature_dim), jnp.float32)
    # NOTE: if loading real PyTorch weights, nn.Linear stores weight [out, in];
    # w[a] here corresponds to linear[a].weight.T.
    w = jax.random.normal(
        kw, (max_action_num, feature_dim, inner_output_dim), jnp.float32) * 0.1
    b = jax.random.normal(
        kb, (max_action_num, 1, inner_output_dim), jnp.float32) * 0.1

    out = jax.block_until_ready(row_wise_linear(x, w, b))
    assert out.shape == (B, max_action_num, inner_output_dim), out.shape
    ref = row_wise_linear_ref(x, w, b)
    assert bool(jnp.all(jnp.isfinite(out)))
    assert bool(jnp.allclose(out, ref, rtol=1e-5, atol=1e-5)), \
        float(jnp.max(jnp.abs(out - ref)))

    # Non-divisible batch: last grid step is partially masked on writeback.
    B2 = 12
    x2 = jax.random.normal(
        jax.random.PRNGKey(1), (B2, max_action_num, feature_dim), jnp.float32)
    out2 = jax.block_until_ready(row_wise_linear(x2, w, b, block_b=8))
    ref2 = row_wise_linear_ref(x2, w, b)
    assert out2.shape == (B2, max_action_num, inner_output_dim), out2.shape
    assert bool(jnp.allclose(out2, ref2, rtol=1e-5, atol=1e-5)), \
        float(jnp.max(jnp.abs(out2 - ref2)))

    print("KERNEL_OK")
</pallas_src>

<mosaic_0001>
module attributes {stable_mosaic.version = 11 : i64} {
  func.func @_row_wise_linear_kernel(%arg0: i32, %arg1: memref<4x384xf32, #tpu.memory_space<vmem>>, %arg2: memref<384x256xf32, #tpu.memory_space<vmem>>, %arg3: memref<1x256xf32, #tpu.memory_space<vmem>>, %arg4: memref<4x256xf32, #tpu.memory_space<vmem>>) attributes {dimension_semantics = [#tpu.dimension_semantics<parallel>], iteration_bounds = array<i64: 1>, scalar_prefetch = 0 : i64, scratch_operands = 0 : i64, tpu.core_type = #tpu.core_type<tc>, window_params = [{transform_indices = @transform_0, window_bounds = array<i64: 4, 384>}, {pipeline_mode = #tpu.pipeline_mode<synchronous>, transform_indices = @transform_1, window_bounds = array<i64: 384, 256>}, {pipeline_mode = #tpu.pipeline_mode<synchronous>, transform_indices = @transform_2, window_bounds = array<i64: 1, 256>}, {transform_indices = @transform_3, window_bounds = array<i64: 4, 256>}]} {
    %c0 = arith.constant 0 : index
    %c0_0 = arith.constant 0 : index
    %0 = vector.load %arg1[%c0, %c0_0] : memref<4x384xf32, #tpu.memory_space<vmem>>, vector<4x384xf32>
    %c0_1 = arith.constant 0 : index
    %c0_2 = arith.constant 0 : index
    %1 = vector.load %arg2[%c0_1, %c0_2] : memref<384x256xf32, #tpu.memory_space<vmem>>, vector<384x256xf32>
    %cst = arith.constant dense<0.000000e+00> : vector<4x256xf32>
    %2 = tpu.matmul %0, %1, %cst {dimension_numbers = #tpu.dot_dimension_numbers<[1], [0], [0], [1], [0, 0, 1, 1], [], []>} : vector<4x384xf32>, vector<384x256xf32>, vector<4x256xf32> -> vector<4x256xf32>
    %c0_3 = arith.constant 0 : index
    %c0_4 = arith.constant 0 : index
    %3 = vector.load %arg3[%c0_3, %c0_4] : memref<1x256xf32, #tpu.memory_space<vmem>>, vector<1x256xf32>
    %4 = vector.broadcast %3 : vector<1x256xf32> to vector<4x256xf32>
    %5 = arith.addf %2, %4 : vector<4x256xf32>
    %cst_5 = arith.constant 0.000000e+00 : f32
    %6 = vector.broadcast %cst_5 : f32 to vector<4x256xf32>
    %7 = arith.maximumf %5, %6 : vector<4x256xf32>
    %c0_6 = arith.constant 0 : index
    %c0_7 = arith.constant 0 : index
    %8 = vector.load %arg4[%c0_6, %c0_7] : memref<4x256xf32, #tpu.memory_space<vmem>>, vector<4x256xf32>
    tpu.vector_store %arg4[%c0_6, %c0_7], %7 {strides = array<i32>} : memref<4x256xf32, #tpu.memory_space<vmem>>, vector<4x256xf32>,
    return
  }
  func.func @transform_0(%arg0: i32) -> (i32, i32) {
    %c0_i32 = arith.constant 0 : i32
    %c0_i32_0 = arith.constant 0 : i32
    return %arg0, %c0_i32 : i32, i32
  }
  func.func @transform_1(%arg0: i32) -> (i32, i32) {
    %c0_i32 = arith.constant 0 : i32
    %c0_i32_0 = arith.constant 0 : i32
    %c0_i32_1 = arith.constant 0 : i32
    return %c0_i32, %c0_i32_0 : i32, i32
  }
  func.func @transform_2(%arg0: i32) -> (i32, i32) {
    %c0_i32 = arith.constant 0 : i32
    %c0_i32_0 = arith.constant 0 : i32
    %c0_i32_1 = arith.constant 0 : i32
    return %c0_i32, %c0_i32_0 : i32, i32
  }
  func.func @transform_3(%arg0: i32) -> (i32, i32) {
    %c0_i32 = arith.constant 0 : i32
    %c0_i32_0 = arith.constant 0 : i32
    return %arg0, %c0_i32 : i32, i32
  }
}

</mosaic_0001>

<llo_original>
// kernel: row_wise_linear.1
$region0: #{row_wise_linear.1}
  #allocation0 [shape = 'u32[]', space=smem, size = 0x4, offset = 0x4, fixed_abs, tag = 'smem constant byte address 0x4 - core index']
  #allocation1 [shape = 'u32[72,128]{1,0:T(1,128)}', space=vmem, size = 0x9000, scoped, tag = 'internal scratch']
  %s0 = inlined_call_operand.vmem [shape: f32[4,384], index: 0, kind: input, shape index: {}]
  %s1 = inlined_call_operand.vmem [shape: f32[384,256], index: 1, kind: input, shape index: {}]
  %s2 = inlined_call_operand.vmem [shape: f32[1,256], index: 2, kind: input, shape index: {}]
  %s3 = inlined_call_operand.vmem [shape: f32[4,256], index: 3, kind: output, shape index: {}]
  %s4 = sld [smem:[#allocation0]]
  $region22: #{row_wise_linear.1} parent=0
    _
  %s6 = ssub.s32 1, %s4
  %s7 = scalar_select 0, %s6, %s4
  // Predicated region
  $region2: #{row_wise_linear.1} parent=0 // pred_check
    _
  $region3: #{row_wise_linear.1} parent=0 // pred_check_branch
    %9 = sbr.rel (0) target = $region5
  $region4: #{row_wise_linear.1} parent=0 // pred_region
    _
  $region5: #{row_wise_linear.1} parent=0 // pred_fallthru
    _
  // Predicated region
  $region6: #{row_wise_linear.1} parent=0 // pred_check
    _
  $region7: #{row_wise_linear.1} parent=0 // pred_check_branch
    %11 = sbr.rel (0) target = $region9
  $region8: #{row_wise_linear.1} parent=0 // pred_region
    _
  $region9: #{row_wise_linear.1} parent=0 // pred_fallthru
    _
  // Predicated region
  $region10: #{row_wise_linear.1} parent=0 // pred_check
    _
  $region11: #{row_wise_linear.1} parent=0 // pred_check_branch
    %13 = sbr.rel (0) target = $region13
  $region12: #{row_wise_linear.1} parent=0 // pred_region
    _
  $region13: #{row_wise_linear.1} parent=0 // pred_fallthru
    _
  %v14 = vld [vmem:[%s0] sm:$0xff]
  %v15 = vld [vmem:[%s0 + $0x8] sm:$0xf]
  %v16 = vld [vmem:[%s1] sm:$0xff]
  %v17 = vld [vmem:[%s1 + $0x8] sm:$0xff]
  %v18 = vld [vmem:[%s1 + $0x10] sm:$0xff]
  %v19 = vld [vmem:[%s1 + $0x18] sm:$0xff]
  %v20 = vld [vmem:[%s1 + $0x20] sm:$0xff]
  %v21 = vld [vmem:[%s1 + $0x28] sm:$0xff]
  %v22 = vld [vmem:[%s1 + $0x30] sm:$0xff]
  %v23 = vld [vmem:[%s1 + $0x38] sm:$0xff]
  %v24 = vld [vmem:[%s1 + $0x40] sm:$0xff]
  %v25 = vld [vmem:[%s1 + $0x48] sm:$0xff]
  %v26 = vld [vmem:[%s1 + $0x50] sm:$0xff]
  %v27 = vld [vmem:[%s1 + $0x58] sm:$0xff]
  %v28 = vld [vmem:[%s1 + $0x60] sm:$0xff]
  %v29 = vld [vmem:[%s1 + $0x68] sm:$0xff]
  %v30 = vld [vmem:[%s1 + $0x70] sm:$0xff]
  %v31 = vld [vmem:[%s1 + $0x78] sm:$0xff]
  %v32 = vld [vmem:[%s1 + $0x80] sm:$0xff]
  %v33 = vld [vmem:[%s1 + $0x88] sm:$0xff]
  %v34 = vld [vmem:[%s1 + $0x90] sm:$0xff]
  %v35 = vld [vmem:[%s1 + $0x98] sm:$0xff]
  %v36 = vld [vmem:[%s1 + $0xa0] sm:$0xff]
  %v37 = vld [vmem:[%s1 + $0xa8] sm:$0xff]
  %v38 = vld [vmem:[%s1 + $0xb0] sm:$0xff]
  %v39 = vld [vmem:[%s1 + $0xb8] sm:$0xff]
  %v40 = vld [vmem:[%s1 + $0xc0] sm:$0xff]
  %v41 = vld [vmem:[%s1 + $0xc8] sm:$0xff]
  %v42 = vld [vmem:[%s1 + $0xd0] sm:$0xff]
  %v43 = vld [vmem:[%s1 + $0xd8] sm:$0xff]
  %v44 = vld [vmem:[%s1 + $0xe0] sm:$0xff]
  %v45 = vld [vmem:[%s1 + $0xe8] sm:$0xff]
  %v46 = vld [vmem:[%s1 + $0xf0] sm:$0xff]
  %v47 = vld [vmem:[%s1 + $0xf8] sm:$0xff]
  %v48 = vld [vmem:[%s1 + $0x100] sm:$0xff]
  %v49 = vld [vmem:[%s1 + $0x108] sm:$0xff]
  %v50 = vld [vmem:[%s1 + $0x110] sm:$0xff]
  %v51 = vld [vmem:[%s1 + $0x118] sm:$0xff]
  %v52 = vld [vmem:[%s1 + $0x120] sm:$0xff]
  %v53 = vld [vmem:[%s1 + $0x128] sm:$0xff]
  %v54 = vld [vmem:[%s1 + $0x130] sm:$0xff]
  %v55 = vld [vmem:[%s1 + $0x138] sm:$0xff]
  %v56 = vld [vmem:[%s1 + $0x140] sm:$0xff]
  %v57 = vld [vmem:[%s1 + $0x148] sm:$0xff]
  %v58 = vld [vmem:[%s1 + $0x150] sm:$0xff]
  %v59 = vld [vmem:[%s1 + $0x158] sm:$0xff]
  %v60 = vld [vmem:[%s1 + $0x160] sm:$0xff]
  %v61 = vld [vmem:[%s1 + $0x168] sm:$0xff]
  %v62 = vld [vmem:[%s1 + $0x170] sm:$0xff]
  %v63 = vld [vmem:[%s1 + $0x178] sm:$0xff]
  %v64 = vld [vmem:[%s1 + $0x180] sm:$0xff]
  %v65 = vld [vmem:[%s1 + $0x188] sm:$0xff]
  %v66 = vld [vmem:[%s1 + $0x190] sm:$0xff]
  %v67 = vld [vmem:[%s1 + $0x198] sm:$0xff]
  %v68 = vld [vmem:[%s1 + $0x1a0] sm:$0xff]
  %v69 = vld [vmem:[%s1 + $0x1a8] sm:$0xff]
  %v70 = vld [vmem:[%s1 + $0x1b0] sm:$0xff]
  %v71 = vld [vmem:[%s1 + $0x1b8] sm:$0xff]
  %v72 = vld [vmem:[%s1 + $0x1c0] sm:$0xff]
  %v73 = vld [vmem:[%s1 + $0x1c8] sm:$0xff]
  %v74 = vld [vmem:[%s1 + $0x1d0] sm:$0xff]
  %v75 = vld [vmem:[%s1 + $0x1d8] sm:$0xff]
  %v76 = vld [vmem:[%s1 + $0x1e0] sm:$0xff]
  %v77 = vld [vmem:[%s1 + $0x1e8] sm:$0xff]
  %v78 = vld [vmem:[%s1 + $0x1f0] sm:$0xff]
  %v79 = vld [vmem:[%s1 + $0x1f8] sm:$0xff]
  %v80 = vld [vmem:[%s1 + $0x200] sm:$0xff]
  %v81 = vld [vmem:[%s1 + $0x208] sm:$0xff]
  %v82 = vld [vmem:[%s1 + $0x210] sm:$0xff]
  %v83 = vld [vmem:[%s1 + $0x218] sm:$0xff]
  %v84 = vld [vmem:[%s1 + $0x220] sm:$0xff]
  %v85 = vld [vmem:[%s1 + $0x228] sm:$0xff]
  %v86 = vld [vmem:[%s1 + $0x230] sm:$0xff]
  %v87 = vld [vmem:[%s1 + $0x238] sm:$0xff]
  %v88 = vld [vmem:[%s1 + $0x240] sm:$0xff]
  %v89 = vld [vmem:[%s1 + $0x248] sm:$0xff]
  %v90 = vld [vmem:[%s1 + $0x250] sm:$0xff]
  %v91 = vld [vmem:[%s1 + $0x258] sm:$0xff]
  %v92 = vld [vmem:[%s1 + $0x260] sm:$0xff]
  %v93 = vld [vmem:[%s1 + $0x268] sm:$0xff]
  %v94 = vld [vmem:[%s1 + $0x270] sm:$0xff]
  %v95 = vld [vmem:[%s1 + $0x278] sm:$0xff]
  %v96 = vld [vmem:[%s1 + $0x280] sm:$0xff]
  %v97 = vld [vmem:[%s1 + $0x288] sm:$0xff]
  %v98 = vld [vmem:[%s1 + $0x290] sm:$0xff]
  %v99 = vld [vmem:[%s1 + $0x298] sm:$0xff]
  %v100 = vld [vmem:[%s1 + $0x2a0] sm:$0xff]
  %v101 = vld [vmem:[%s1 + $0x2a8] sm:$0xff]
  %v102 = vld [vmem:[%s1 + $0x2b0] sm:$0xff]
  %v103 = vld [vmem:[%s1 + $0x2b8] sm:$0xff]
  %v104 = vld [vmem:[%s1 + $0x2c0] sm:$0xff]
  %v105 = vld [vmem:[%s1 + $0x2c8] sm:$0xff]
  %v106 = vld [vmem:[%s1 + $0x2d0] sm:$0xff]
  %v107 = vld [vmem:[%s1 + $0x2d8] sm:$0xff]
  %v108 = vld [vmem:[%s1 + $0x2e0] sm:$0xff]
  %v109 = vld [vmem:[%s1 + $0x2e8] sm:$0xff]
  %v110 = vld [vmem:[%s1 + $0x2f0] sm:$0xff]
  %v111 = vld [vmem:[%s1 + $0x2f8] sm:$0xff]
  %v112 = vld [vmem:[%s2] sm:$0x3]
  %v114 = vperm.slane %v112, 0
  %v115 = vperm.slane %v112, 1
  %120 = vst [vmem:[#allocation1] ss:$2 sm:$0xff] %v14
  %s121 = scalar_lea.vmem [#allocation1], 16
  %122 = vst [vmem:[%s121] ss:$2 sm:$0xff] %v15
  %v123 = vld.sshfl [vmem:[#allocation1] sm:$0xff pattern:$0x75316420]
  %v124 = vld.sshfl [vmem:[#allocation1 + $0x8] sm:$0xff pattern:$0x75316420]
  %v125 = vld.sshfl [vmem:[#allocation1 + $0x10] sm:$0xff pattern:$0x75316420]
  %129 = vmatpush.msra.mxu0 %v46
  %130 = vmatpush.msra.mxu0 %v44
  %131 = vmatpush.msra.mxu0 %v42
  %132 = vmatpush.msra.mxu0 %v40
  %133 = vmatpush.msra.mxu0 %v38
  %134 = vmatpush.msra.mxu0 %v36
  %135 = vmatpush.msra.mxu0 %v34
  %136 = vmatpush.msra.mxu0 %v32
  %137 = vmatpush.msra.mxu0 %v30
  %138 = vmatpush.msra.mxu0 %v28
  %139 = vmatpush.msra.mxu0 %v26
  %140 = vmatpush.msra.mxu0 %v24
  %141 = vmatpush.msra.mxu0 %v22
  %142 = vmatpush.msra.mxu0 %v20
  %143 = vmatpush.msra.mxu0 %v18
  %144 = vmatpush.msra.mxu0 %v16
  %145 = vmatmul.f32.gmra.mxu0 %v123
  %v146 = vpop.f32.mrf.mxu0
  %v147 = vadd.f32 %v114, %v146
  %148 = vdwg.mxu0
  %149 = vmatpush.msra.mxu0 %v78
  %150 = vmatpush.msra.mxu0 %v76
  %151 = vmatpush.msra.mxu0 %v74
  %152 = vmatpush.msra.mxu0 %v72
  %153 = vmatpush.msra.mxu0 %v70
  %154 = vmatpush.msra.mxu0 %v68
  %155 = vmatpush.msra.mxu0 %v66
  %156 = vmatpush.msra.mxu0 %v64
  %157 = vmatpush.msra.mxu0 %v62
  %158 = vmatpush.msra.mxu0 %v60
  %159 = vmatpush.msra.mxu0 %v58
  %160 = vmatpush.msra.mxu0 %v56
  %161 = vmatpush.msra.mxu0 %v54
  %162 = vmatpush.msra.mxu0 %v52
  %163 = vmatpush.msra.mxu0 %v50
  %164 = vmatpush.msra.mxu0 %v48
  %165 = vmatmul.f32.gmra.mxu0 %v124
  %v166 = vpop.f32.mrf.mxu0
  %v167 = vadd.f32 %v147, %v166
  %168 = vdwg.mxu0
  %169 = vmatpush.msra.mxu0 %v110
  %170 = vmatpush.msra.mxu0 %v108
  %171 = vmatpush.msra.mxu0 %v106
  %172 = vmatpush.msra.mxu0 %v104
  %173 = vmatpush.msra.mxu0 %v102
  %174 = vmatpush.msra.mxu0 %v100
  %175 = vmatpush.msra.mxu0 %v98
  %176 = vmatpush.msra.mxu0 %v96
  %177 = vmatpush.msra.mxu0 %v94
  %178 = vmatpush.msra.mxu0 %v92
  %179 = vmatpush.msra.mxu0 %v90
  %180 = vmatpush.msra.mxu0 %v88
  %181 = vmatpush.msra.mxu0 %v86
  %182 = vmatpush.msra.mxu0 %v84
  %183 = vmatpush.msra.mxu0 %v82
  %184 = vmatpush.msra.mxu0 %v80
  %185 = vmatmul.f32.gmra.mxu0 %v125
  %v186 = vpop.f32.mrf.mxu0
  %v187 = vadd.f32 %v167, %v186
  %188 = vdwg.mxu0
  %189 = vmatpush.msra.mxu0 %v47
  %190 = vmatpush.msra.mxu0 %v45
  %191 = vmatpush.msra.mxu0 %v43
  %192 = vmatpush.msra.mxu0 %v41
  %193 = vmatpush.msra.mxu0 %v39
  %194 = vmatpush.msra.mxu0 %v37
  %195 = vmatpush.msra.mxu0 %v35
  %196 = vmatpush.msra.mxu0 %v33
  %197 = vmatpush.msra.mxu0 %v31
  %198 = vmatpush.msra.mxu0 %v29
  %199 = vmatpush.msra.mxu0 %v27
  %200 = vmatpush.msra.mxu0 %v25
  %201 = vmatpush.msra.mxu0 %v23
  %202 = vmatpush.msra.mxu0 %v21
  %203 = vmatpush.msra.mxu0 %v19
  %204 = vmatpush.msra.mxu0 %v17
  %205 = vmatmul.f32.gmra.mxu0 %v123
  %v206 = vpop.f32.mrf.mxu0
  %v207 = vadd.f32 %v115, %v206
  %208 = vdwg.mxu0
  %209 = vmatpush.msra.mxu0 %v79
  %210 = vmatpush.msra.mxu0 %v77
  %211 = vmatpush.msra.mxu0 %v75
  %212 = vmatpush.msra.mxu0 %v73
  %213 = vmatpush.msra.mxu0 %v71
  %214 = vmatpush.msra.mxu0 %v69
  %215 = vmatpush.msra.mxu0 %v67
  %216 = vmatpush.msra.mxu0 %v65
  %217 = vmatpush.msra.mxu0 %v63
  %218 = vmatpush.msra.mxu0 %v61
  %219 = vmatpush.msra.mxu0 %v59
  %220 = vmatpush.msra.mxu0 %v57
  %221 = vmatpush.msra.mxu0 %v55
  %222 = vmatpush.msra.mxu0 %v53
  %223 = vmatpush.msra.mxu0 %v51
  %224 = vmatpush.msra.mxu0 %v49
  %225 = vmatmul.f32.gmra.mxu0 %v124
  %v226 = vpop.f32.mrf.mxu0
  %v227 = vadd.f32 %v207, %v226
  %228 = vdwg.mxu0
  %229 = vmatpush.msra.mxu0 %v111
  %230 = vmatpush.msra.mxu0 %v109
  %231 = vmatpush.msra.mxu0 %v107
  %232 = vmatpush.msra.mxu0 %v105
  %233 = vmatpush.msra.mxu0 %v103
  %234 = vmatpush.msra.mxu0 %v101
  %235 = vmatpush.msra.mxu0 %v99
  %236 = vmatpush.msra.mxu0 %v97
  %237 = vmatpush.msra.mxu0 %v95
  %238 = vmatpush.msra.mxu0 %v93
  %239 = vmatpush.msra.mxu0 %v91
  %240 = vmatpush.msra.mxu0 %v89
  %241 = vmatpush.msra.mxu0 %v87
  %242 = vmatpush.msra.mxu0 %v85
  %243 = vmatpush.msra.mxu0 %v83
  %244 = vmatpush.msra.mxu0 %v81
  %245 = vmatmul.f32.gmra.mxu0 %v125
  %v246 = vpop.f32.mrf.mxu0
  %v247 = vadd.f32 %v227, %v246
  %248 = vdwg.mxu0
  %v249 = vmax.f32 %v187, 0.0
  %v250 = vmax.f32 %v247, 0.0
  %v253 = vrot.slane %v250, 4
  %vm254 = vcmask 1043456
  %v255 = vsel %vm254, %v249, %v253
  %257 = vst [vmem:[%s3] sm:$0xff] %v255
  // Predicated region
  $region14: #{row_wise_linear.1} parent=0 // pred_check
    _
  $region15: #{row_wise_linear.1} parent=0 // pred_check_branch
    %259 = sbr.rel (0) target = $region17
  $region16: #{row_wise_linear.1} parent=0 // pred_region
    _
  $region17: #{row_wise_linear.1} parent=0 // pred_fallthru
    _
  // Predicated region
  $region18: #{row_wise_linear.1} parent=0 // pred_check
    _
  $region19: #{row_wise_linear.1} parent=0 // pred_check_branch
    %261 = sbr.rel (0) target = $region21
  $region20: #{row_wise_linear.1} parent=0 // pred_region
    _
  $region21: #{row_wise_linear.1} parent=0 // pred_fallthru
    _

</llo_original>
